<compile_context>
chip_gen: v6e
topology: v6e:2x2x1
jax: 0.10.0
libtpu: 0.0.40
codegen_flags: <defaults>
</compile_context>

<pallas_src>
import functools

import jax
import jax.numpy as jnp
from jax import lax
from jax.experimental import pallas as pl
from jax.experimental.pallas import tpu as pltpu

IN_FEATURES = 196608   # fixed by the module definition
OUT_FEATURES = 10

TK = 49152             # K tile: 196608 = 4 * 49152 -> 4 pipelined grid steps
ACC_LANES = 512        # lane width of the per-batch-row f32 accumulators


def linear_kernel(x_ref, w_ref, bias_ref, o_ref, acc_ref):
    """One K-tile of y = x @ W.T + b, accumulated across the K grid axis.

    x_ref:    (B, TK)   f32  activation tile
    w_ref:    (N, TK)   f32  weight tile, native PyTorch (N, K) layout
    bias_ref: (1, N)    f32
    o_ref:    (B, N)    f32  resident output block (written on the last step)
    acc_ref:  (B, N, C) f32  lane-resident partial sums, persist across steps
    """
    k = pl.program_id(0)
    k_steps = pl.num_programs(0)

    batch, tk = x_ref.shape
    chunks = tk // ACC_LANES

    @pl.when(k == 0)
    def _():
        acc_ref[...] = jnp.zeros_like(acc_ref)

    # Transpose-free VPU contraction: for each batch row b, accumulate
    # w[:, chunk] * x[b, chunk] into a (N, ACC_LANES) accumulator.  Pure
    # VALU work (plus a cheap sublane broadcast of the x row); no weight
    # relayout and no MXU latch traffic in the hot loop.
    def chunk_body(c, accs):
        off = pl.multiple_of(c * ACC_LANES, ACC_LANES)
        w_chunk = w_ref[:, pl.ds(off, ACC_LANES)]                  # (N, C)
        return tuple(
            accs[b] + w_chunk * x_ref[pl.ds(b, 1), pl.ds(off, ACC_LANES)]
            for b in range(batch))

    accs = lax.fori_loop(
        0, chunks, chunk_body,
        tuple(acc_ref[b] for b in range(batch)))
    for b in range(batch):
        acc_ref[b] = accs[b]

    @pl.when(k == k_steps - 1)
    def _():
        # Cross-lane reduction of each (N, C) accumulator straight into a
        # lane-dense (1, N) row via a tiny ones-vector contraction; bias is
        # folded in here so no XLA epilogue op is needed.
        ones_row = jnp.ones((1, ACC_LANES), jnp.float32)
        for b in range(batch):
            row = lax.dot_general(
                ones_row, acc_ref[b],
                dimension_numbers=(((1,), (1,)), ((), ())),
                preferred_element_type=jnp.float32)                # (1, N)
            o_ref[pl.ds(b, 1), :] = row + bias_ref[...]


@functools.partial(jax.jit, static_argnames=("tk",))
def jx_forward(x, weight, bias, *, tk=TK):
    """x: (B, K) f32, weight: (N, K) f32 (native PyTorch layout), bias: (N,)."""
    batch, k_dim = x.shape
    n_out, kw = weight.shape
    assert k_dim == kw, "weight K must match input K"
    assert k_dim % tk == 0, "K must divide evenly into K tiles"
    assert tk % ACC_LANES == 0, "K tile must divide into accumulator chunks"
    k_steps = k_dim // tk

    bias2d = bias.reshape(1, n_out).astype(jnp.float32)

    return pl.pallas_call(
        linear_kernel,
        out_shape=jax.ShapeDtypeStruct((batch, n_out), jnp.float32),
        grid_spec=pltpu.PrefetchScalarGridSpec(
            num_scalar_prefetch=0,
            grid=(k_steps,),
            in_specs=[
                # x block: sublane dim == full B, lane dim tk (mult. of 128)
                pl.BlockSpec((batch, tk), lambda k: (0, k)),
                # weight block: native (N, K) layout, sublane dim == full N
                pl.BlockSpec((n_out, tk), lambda k: (0, k)),
                # bias: tiny constant block
                pl.BlockSpec((1, n_out), lambda k: (0, 0)),
            ],
            # Final (B, N) output, resident across the whole K reduction.
            out_specs=pl.BlockSpec((batch, n_out), lambda k: (0, 0)),
            scratch_shapes=[
                pltpu.VMEM((batch, n_out, ACC_LANES), jnp.float32),
            ],
        ),
        compiler_params=pltpu.CompilerParams(
            dimension_semantics=("arbitrary",),
        ),
        cost_estimate=pl.CostEstimate(
            flops=2 * batch * k_dim * n_out,
            transcendentals=0,
            bytes_accessed=(batch * k_dim + n_out * k_dim + n_out
                            + batch * n_out) * 4,
        ),
    )(x, weight, bias2d)


if __name__ == "__main__":
    key = jax.random.PRNGKey(0)
    kx, kw, kb = jax.random.split(key, 3)

    B = 2
    # Deterministic parameter init mimicking nn.Linear's U(-1/sqrt(K), 1/sqrt(K)).
    bound = 1.0 / (IN_FEATURES ** 0.5)
    weight = jax.random.uniform(
        kw, (OUT_FEATURES, IN_FEATURES), jnp.float32, -bound, bound
    )
    bias = jax.random.uniform(kb, (OUT_FEATURES,), jnp.float32, -bound, bound)
    x = jax.random.normal(kx, (B, IN_FEATURES), jnp.float32)

    y = jax.block_until_ready(jx_forward(x, weight, bias))

    # Reference check in plain JAX.
    y_ref = x @ weight.T + bias
    assert y.shape == (B, OUT_FEATURES)
    assert jnp.allclose(y, y_ref, atol=1e-3, rtol=1e-3), "mismatch vs reference"

    print("KERNEL_OK")
</pallas_src>

<mosaic_0001>
module attributes {stable_mosaic.version = 11 : i64} {
  func.func @linear_kernel(%arg0: i32, %arg1: memref<2x49152xf32, #tpu.memory_space<vmem>>, %arg2: memref<10x49152xf32, #tpu.memory_space<vmem>>, %arg3: memref<1x10xf32, #tpu.memory_space<vmem>>, %arg4: memref<2x10xf32, #tpu.memory_space<vmem>>, %arg5: memref<2x10x512xf32, #tpu.memory_space<vmem>>) attributes {dimension_semantics = [#tpu.dimension_semantics<arbitrary>], iteration_bounds = array<i64: 4>, scalar_prefetch = 0 : i64, scratch_operands = 1 : i64, tpu.core_type = #tpu.core_type<tc>, window_params = [{transform_indices = @transform_0, window_bounds = array<i64: 2, 49152>}, {transform_indices = @transform_1, window_bounds = array<i64: 10, 49152>}, {pipeline_mode = #tpu.pipeline_mode<synchronous>, transform_indices = @transform_2, window_bounds = array<i64: 1, 10>}, {pipeline_mode = #tpu.pipeline_mode<synchronous>, transform_indices = @transform_3, window_bounds = array<i64: 2, 10>}]} {
    %c0_i32 = arith.constant 0 : i32
    %0 = arith.cmpi eq, %arg0, %c0_i32 : i32
    %1 = arith.extui %0 : i1 to i32
    %c0_i32_0 = arith.constant 0 : i32
    %2 = arith.cmpi ne, %1, %c0_i32_0 : i32
    scf.if %2 {
      %cst = arith.constant 0.000000e+00 : f32
      %18 = vector.broadcast %cst : f32 to vector<2x10x512xf32>
      %c0_14 = arith.constant 0 : index
      %c0_15 = arith.constant 0 : index
      %c0_16 = arith.constant 0 : index
      %19 = vector.load %arg5[%c0_14, %c0_15, %c0_16] : memref<2x10x512xf32, #tpu.memory_space<vmem>>, vector<2x10x512xf32>
      tpu.vector_store %arg5[%c0_14, %c0_15, %c0_16], %18 {strides = array<i32>} : memref<2x10x512xf32, #tpu.memory_space<vmem>>, vector<2x10x512xf32>,
    } else {
    }
    %c0 = arith.constant 0 : index
    %c0_1 = arith.constant 0 : index
    %c0_2 = arith.constant 0 : index
    %3 = vector.load %arg5[%c0, %c0_1, %c0_2] : memref<2x10x512xf32, #tpu.memory_space<vmem>>, vector<1x10x512xf32>
    %4 = vector.shape_cast %3 : vector<1x10x512xf32> to vector<10x512xf32>
    %c1 = arith.constant 1 : index
    %c0_3 = arith.constant 0 : index
    %c0_4 = arith.constant 0 : index
    %5 = vector.load %arg5[%c1, %c0_3, %c0_4] : memref<2x10x512xf32, #tpu.memory_space<vmem>>, vector<1x10x512xf32>
    %6 = vector.shape_cast %5 : vector<1x10x512xf32> to vector<10x512xf32>
    %c0_i32_5 = arith.constant 0 : i32
    %c96_i32 = arith.constant 96 : i32
    %7 = arith.addi %c0_i32_5, %c96_i32 : i32
    %c1_i32 = arith.constant 1 : i32
    %8:2 = scf.for %arg6 = %c0_i32_5 to %7 step %c1_i32 iter_args(%arg7 = %4, %arg8 = %6) -> (vector<10x512xf32>, vector<10x512xf32>)  : i32 {
      %c512_i32 = arith.constant 512 : i32
      %18 = arith.muli %arg6, %c512_i32 : i32
      %19 = tpu.assume_multiple %18, 512 : i32
      %c0_14 = arith.constant 0 : index
      %20 = arith.index_cast %19 : i32 to index
      %21 = vector.load %arg2[%c0_14, %20] : memref<10x49152xf32, #tpu.memory_space<vmem>>, vector<10x512xf32>
      %c0_15 = arith.constant 0 : index
      %22 = arith.index_cast %19 : i32 to index
      %23 = vector.load %arg1[%c0_15, %22] : memref<2x49152xf32, #tpu.memory_space<vmem>>, vector<1x512xf32>
      %24 = vector.broadcast %23 : vector<1x512xf32> to vector<10x512xf32>
      %25 = arith.mulf %21, %24 : vector<10x512xf32>
      %26 = arith.addf %arg7, %25 : vector<10x512xf32>
      %c1_16 = arith.constant 1 : index
      %27 = arith.index_cast %19 : i32 to index
      %28 = vector.load %arg1[%c1_16, %27] : memref<2x49152xf32, #tpu.memory_space<vmem>>, vector<1x512xf32>
      %29 = vector.broadcast %28 : vector<1x512xf32> to vector<10x512xf32>
      %30 = arith.mulf %21, %29 : vector<10x512xf32>
      %31 = arith.addf %arg8, %30 : vector<10x512xf32>
      scf.yield %26, %31 : vector<10x512xf32>, vector<10x512xf32>
    }
    %c96_i32_6 = arith.constant 96 : i32
    %c0_7 = arith.constant 0 : index
    %c0_8 = arith.constant 0 : index
    %c0_9 = arith.constant 0 : index
    %9 = vector.load %arg5[%c0_7, %c0_8, %c0_9] : memref<2x10x512xf32, #tpu.memory_space<vmem>>, vector<1x10x512xf32>
    %10 = vector.shape_cast %9 : vector<1x10x512xf32> to vector<10x512xf32>
    %11 = vector.shape_cast %8#0 : vector<10x512xf32> to vector<1x10x512xf32>
    tpu.vector_store %arg5[%c0_7, %c0_8, %c0_9], %11 {strides = array<i32>} : memref<2x10x512xf32, #tpu.memory_space<vmem>>, vector<1x10x512xf32>,
    %c1_10 = arith.constant 1 : index
    %c0_11 = arith.constant 0 : index
    %c0_12 = arith.constant 0 : index
    %12 = vector.load %arg5[%c1_10, %c0_11, %c0_12] : memref<2x10x512xf32, #tpu.memory_space<vmem>>, vector<1x10x512xf32>
    %13 = vector.shape_cast %12 : vector<1x10x512xf32> to vector<10x512xf32>
    %14 = vector.shape_cast %8#1 : vector<10x512xf32> to vector<1x10x512xf32>
    tpu.vector_store %arg5[%c1_10, %c0_11, %c0_12], %14 {strides = array<i32>} : memref<2x10x512xf32, #tpu.memory_space<vmem>>, vector<1x10x512xf32>,
    %c3_i32 = arith.constant 3 : i32
    %15 = arith.cmpi eq, %arg0, %c3_i32 : i32
    %16 = arith.extui %15 : i1 to i32
    %c0_i32_13 = arith.constant 0 : i32
    %17 = arith.cmpi ne, %16, %c0_i32_13 : i32
    scf.if %17 {
      %cst = arith.constant 1.000000e+00 : f32
      %18 = vector.broadcast %cst : f32 to vector<1x512xf32>
      %c0_14 = arith.constant 0 : index
      %c0_15 = arith.constant 0 : index
      %c0_16 = arith.constant 0 : index
      %19 = vector.load %arg5[%c0_14, %c0_15, %c0_16] : memref<2x10x512xf32, #tpu.memory_space<vmem>>, vector<1x10x512xf32>
      %20 = vector.shape_cast %19 : vector<1x10x512xf32> to vector<10x512xf32>
      %cst_17 = arith.constant dense<0.000000e+00> : vector<1x10xf32>
      %21 = tpu.matmul %18, %20, %cst_17 {dimension_numbers = #tpu.dot_dimension_numbers<[1], [1], [0], [0], [0, 0, 1, 0], [], []>} : vector<1x512xf32>, vector<10x512xf32>, vector<1x10xf32> -> vector<1x10xf32>
      %c0_18 = arith.constant 0 : index
      %c0_19 = arith.constant 0 : index
      %22 = vector.load %arg3[%c0_18, %c0_19] : memref<1x10xf32, #tpu.memory_space<vmem>>, vector<1x10xf32>
      %23 = arith.addf %21, %22 : vector<1x10xf32>
      %c0_20 = arith.constant 0 : index
      %c0_21 = arith.constant 0 : index
      %24 = vector.load %arg4[%c0_20, %c0_21] : memref<2x10xf32, #tpu.memory_space<vmem>>, vector<1x10xf32>
      tpu.vector_store %arg4[%c0_20, %c0_21], %23 {strides = array<i32>} : memref<2x10xf32, #tpu.memory_space<vmem>>, vector<1x10xf32>,
      %c1_22 = arith.constant 1 : index
      %c0_23 = arith.constant 0 : index
      %c0_24 = arith.constant 0 : index
      %25 = vector.load %arg5[%c1_22, %c0_23, %c0_24] : memref<2x10x512xf32, #tpu.memory_space<vmem>>, vector<1x10x512xf32>
      %26 = vector.shape_cast %25 : vector<1x10x512xf32> to vector<10x512xf32>
      %cst_25 = arith.constant dense<0.000000e+00> : vector<1x10xf32>
      %27 = tpu.matmul %18, %26, %cst_25 {dimension_numbers = #tpu.dot_dimension_numbers<[1], [1], [0], [0], [0, 0, 1, 0], [], []>} : vector<1x512xf32>, vector<10x512xf32>, vector<1x10xf32> -> vector<1x10xf32>
      %c0_26 = arith.constant 0 : index
      %c0_27 = arith.constant 0 : index
      %28 = vector.load %arg3[%c0_26, %c0_27] : memref<1x10xf32, #tpu.memory_space<vmem>>, vector<1x10xf32>
      %29 = arith.addf %27, %28 : vector<1x10xf32>
      %c1_28 = arith.constant 1 : index
      %c0_29 = arith.constant 0 : index
      %30 = vector.load %arg4[%c1_28, %c0_29] : memref<2x10xf32, #tpu.memory_space<vmem>>, vector<1x10xf32>
      tpu.vector_store %arg4[%c1_28, %c0_29], %29 {strides = array<i32>} : memref<2x10xf32, #tpu.memory_space<vmem>>, vector<1x10xf32>,
    } else {
    }
    return
  }
  func.func @transform_0(%arg0: i32) -> (i32, i32) {
    %c0_i32 = arith.constant 0 : i32
    %c0_i32_0 = arith.constant 0 : i32
    return %c0_i32, %arg0 : i32, i32
  }
  func.func @transform_1(%arg0: i32) -> (i32, i32) {
    %c0_i32 = arith.constant 0 : i32
    %c0_i32_0 = arith.constant 0 : i32
    return %c0_i32, %arg0 : i32, i32
  }
  func.func @transform_2(%arg0: i32) -> (i32, i32) {
    %c0_i32 = arith.constant 0 : i32
    %c0_i32_0 = arith.constant 0 : i32
    %c0_i32_1 = arith.constant 0 : i32
    return %c0_i32, %c0_i32_0 : i32, i32
  }
  func.func @transform_3(%arg0: i32) -> (i32, i32) {
    %c0_i32 = arith.constant 0 : i32
    %c0_i32_0 = arith.constant 0 : i32
    %c0_i32_1 = arith.constant 0 : i32
    return %c0_i32, %c0_i32_0 : i32, i32
  }
}

</mosaic_0001>

<llo_original>
// kernel: jx_forward.1
$region0: #{jx_forward.1}
  #allocation0 [shape = 'u32[]', space=smem, size = 0x4, offset = 0x4, fixed_abs, tag = 'smem constant byte address 0x4 - core index']
  #allocation1 [shape = 'u32[144,128]{1,0:T(1,128)}', space=vmem, size = 0x12000, scoped, tag = 'internal scratch']
  #allocation2 [shape = 'f32[2,10,512]{2,1,0:T(8,128)}', space=vmem, size = 0x10000, scoped, tag = 'scratch operand']
  %s0 = inlined_call_operand.hbm [shape: f32[2,196608], index: 0, kind: input, shape index: {}]
  %s1 = inlined_call_operand.hbm [shape: f32[10,196608], index: 1, kind: input, shape index: {}]
  %s2 = inlined_call_operand.hbm [shape: f32[1,10], index: 2, kind: input, shape index: {}]
  %s3 = inlined_call_operand.hbm [shape: f32[2,10], index: 3, kind: output, shape index: {}]
  %s4 = sld [smem:[#allocation0]]
  $region72: #{jx_forward.1} parent=0
    _
  %s6 = ssub.s32 1, %s4
  %s7 = scalar_select 0, %s6, %s4
  $region1: #{jx_forward.1} parent=0
    #allocation3 [shape = 'u8[786432]{0}', space=vmem, size = 0xc0000, scoped, tag = 'input window, operand 0']
    #allocation4 [shape = 's32[2]{0}', space=sflag, size = 0x8, scoped, tag = 'scoped memory for jx_forward.1']
    #allocation5 [shape = 's32[2]{0}', space=sflag, size = 0x8, scoped, tag = 'scoped memory for jx_forward.1']
    #allocation6 [shape = 'u8[6291456]{0}', space=vmem, size = 0x600000, scoped, tag = 'input window, operand 1']
    #allocation7 [shape = 's32[2]{0}', space=sflag, size = 0x8, scoped, tag = 'scoped memory for jx_forward.1']
    #allocation8 [shape = 'u8[512]{0}', space=vmem, size = 0x400, scoped, tag = 'input window, operand 2, single buffered']
    #allocation9 [shape = 'u8[1024]{0}', space=vmem, size = 0x400, scoped, tag = 'output window, operand 0, single buffered']
    %8 = vsyncpa [#allocation4], 0
    %s9 = scalar_lea.sflag [#allocation4], 1
    %10 = vsyncpa %s9, 0
    %11 = vsyncpa [#allocation7], 0
    %s12 = scalar_lea.sflag [#allocation7], 1
    %13 = vsyncpa %s12, 0
    %14 = vsyncpa [#allocation5], 0
    loop: start=0, step=1, limit=6
    $region2: #{jx_forward.1} parent=1 // loop_pre_header
      _
    $region3: #{jx_forward.1} parent=1 // loop_header
      %s16 = sphi 0, %s20
      %p17 = scmp.ge.s32.totalorder %s16, 6
      %s26 = sphi 0, %s28
      %s29 = sphi 0, %s26
      %s30 = sphi 0, %s29
      %s46 = sphi 0, %s30
      %s52 = sphi 0, %s54
      %s55 = sphi 0, %s52
      %s56 = sphi 0, %s55
      %s72 = sphi 0, %s56
      %s76 = sphi 0, %s76
      %s78 = sphi 0, %s76
      %s79 = sphi 0, %s78
      %s93 = sphi 0, %s79
      %s97 = sphi 0, %s97
      %s99 = sphi 0, %s97
      %s100 = sphi 0, %s99
      %s114 = sphi 0, %s100
    $region4: #{jx_forward.1} parent=1 // loop_header_branch
      %19 = sbr.rel (%p17) target = $region8
    $region5: #{jx_forward.1} parent=1 // loop_body
      %s21 = ssub.s32 %s16, 1
      %s22 = ssub.s32 %s16, 2
      %s23 = sadd.s32 %s16, 1
      %s24 = ssub.s32 %s16, %s23
      %p25 = scmp.eq.s32.totalorder %s24, 0
      %s27 = sadd.s32 %s26, 1
      %s28 = scalar_select %p25, %s26, %s27
      %p31 = pneg %p25
      %p32 = scmp.eq.s32.totalorder %s16, 3
      %p33 = por %p31, %p32
      %p34 = scmp.ne.s32.totalorder %s26, %s29
      %p35 = scmp.eq.s32.totalorder %s16, 0
      %p36 = por %p34, %p35
      %p37 = scmp.ne.s32.totalorder %s26, %s29
      %p38 = scmp.eq.s32.totalorder %s21, 3
      %p39 = por %p37, %p38
      %p40 = scmp.ne.s32.totalorder %s29, %s30
      %p41 = scmp.eq.s32.totalorder %s21, 0
      %p42 = por %p40, %p41
      %p43 = scmp.ne.s32.totalorder %s29, %s30
      %p44 = scmp.eq.s32.totalorder %s22, 3
      %p45 = por %p43, %p44
      %p47 = scmp.ne.s32.totalorder %s30, %s46
      %p48 = scmp.eq.s32.totalorder %s22, 0
      %p49 = por %p47, %p48
      %s50 = ssub.s32 %s16, %s23
      %p51 = scmp.eq.s32.totalorder %s50, 0
      %s53 = sadd.s32 %s52, 1
      %s54 = scalar_select %p51, %s52, %s53
      %p57 = pneg %p51
      %p58 = scmp.eq.s32.totalorder %s16, 3
      %p59 = por %p57, %p58
      %p60 = scmp.ne.s32.totalorder %s52, %s55
      %p61 = scmp.eq.s32.totalorder %s16, 0
      %p62 = por %p60, %p61
      %p63 = scmp.ne.s32.totalorder %s52, %s55
      %p64 = scmp.eq.s32.totalorder %s21, 3
      %p65 = por %p63, %p64
      %p66 = scmp.ne.s32.totalorder %s55, %s56
      %p67 = scmp.eq.s32.totalorder %s21, 0
      %p68 = por %p66, %p67
      %p69 = scmp.ne.s32.totalorder %s55, %s56
      %p70 = scmp.eq.s32.totalorder %s22, 3
      %p71 = por %p69, %p70
      %p73 = scmp.ne.s32.totalorder %s56, %s72
      %p74 = scmp.eq.s32.totalorder %s22, 0
      %p75 = por %p73, %p74
      %s77 = sadd.s32 %s76, 1
      %p80 = scmp.eq.s32.totalorder %s16, 3
      %p81 = scmp.ne.s32.totalorder %s76, %s78
      %p82 = scmp.eq.s32.totalorder %s16, 0
      %p83 = por %p81, %p82
      %p84 = scmp.ne.s32.totalorder %s76, %s78
      %p85 = scmp.eq.s32.totalorder %s21, 3
      %p86 = por %p84, %p85
      %p87 = scmp.ne.s32.totalorder %s78, %s79
      %p88 = scmp.eq.s32.totalorder %s21, 0
      %p89 = por %p87, %p88
      %p90 = scmp.ne.s32.totalorder %s78, %s79
      %p91 = scmp.eq.s32.totalorder %s22, 3
      %p92 = por %p90, %p91
      %p94 = scmp.ne.s32.totalorder %s79, %s93
      %p95 = scmp.eq.s32.totalorder %s22, 0
      %p96 = por %p94, %p95
      %s98 = sadd.s32 %s97, 1
      %p101 = scmp.eq.s32.totalorder %s16, 3
      %p102 = scmp.ne.s32.totalorder %s97, %s99
      %p103 = scmp.eq.s32.totalorder %s16, 0
      %p104 = por %p102, %p103
      %p105 = scmp.ne.s32.totalorder %s97, %s99
      %p106 = scmp.eq.s32.totalorder %s21, 3
      %p107 = por %p105, %p106
      %p108 = scmp.ne.s32.totalorder %s99, %s100
      %p109 = scmp.eq.s32.totalorder %s21, 0
      %p110 = por %p108, %p109
      %p111 = scmp.ne.s32.totalorder %s99, %s100
      %p112 = scmp.eq.s32.totalorder %s22, 3
      %p113 = por %p111, %p112
      %p115 = scmp.ne.s32.totalorder %s100, %s114
      %p116 = scmp.eq.s32.totalorder %s22, 0
      %p117 = por %p115, %p116
      %p118 = scmp.le.s32.totalorder 1, %s16
      %p119 = scmp.lt.s32.totalorder %s16, 5
      %p120 = pnand %p118, %p119
      %p121 = pneg %p120
      // Predicated region
      $region9: #{jx_forward.1} parent=5 // pred_check
        _
      $region10: #{jx_forward.1} parent=5 // pred_check_branch
        %123 = sbr.rel (%p120) target = $region12
      $region11: #{jx_forward.1} parent=5 // pred_region
        %s124 = ssub.s32 %s16, 1
        // Predicated region
        $region13: #{jx_forward.1} parent=11 // pred_check
          %p125 = pneg %p89
        $region14: #{jx_forward.1} parent=11 // pred_check_branch
          %127 = sbr.rel (%p125) target = $region16
        $region15: #{jx_forward.1} parent=11 // pred_region
          %s129 = ssub.s32 16, 16
          %130 = vsyncadd [#allocation7], %s129
          %s132 = sshll.u32 [#allocation8], 4
          %s133 = int_to_ptr.vmem [resolvable:$true] %s132
          %135 = dma.hbm_to_vmem [thread:$0]  %s2, 16, %s133, [#allocation7]
        $region16: #{jx_forward.1} parent=11 // pred_fallthru
          _
      $region12: #{jx_forward.1} parent=5 // pred_fallthru
        _
      %p136 = scmp.lt.s32.totalorder %s16, 4
      // Predicated region
      $region17: #{jx_forward.1} parent=5 // pred_check
        %p137 = pneg %p136
      $region18: #{jx_forward.1} parent=5 // pred_check_branch
        %139 = sbr.rel (%p137) target = $region20
      $region19: #{jx_forward.1} parent=5 // pred_region
        // Predicated region
        $region21: #{jx_forward.1} parent=19 // pred_check
          %p140 = pneg %p36
        $region22: #{jx_forward.1} parent=19 // pred_check_branch
          %142 = sbr.rel (%p140) target = $region24
        $region23: #{jx_forward.1} parent=19 // pred_region
          %s143 = sand.u32 %s26, 1
          %s144 = scalar_lea.sflag [#allocation4], %s143
          %s145 = sand.u32 %s26, 1
          %s146 = smul.addr %s145, 768
          %s147 = scalar_lea.vmem [#allocation3], %s146
          %s148 = smul.u32 384, %s16
          %s150 = ssub.s32 12288, 12288
          %151 = vsyncadd %s144, %s150
          %s152 = smul.addr %s148, 32
          %s153 = scalar_lea.hbm %s0, %s152
          %s155 = sshll.u32 %s147, 4
          %s156 = int_to_ptr.vmem [resolvable:$true] %s155
          %158 = dma.hbm_to_vmem [thread:$0]  %s153, 12288, %s156, %s144
        $region24: #{jx_forward.1} parent=19 // pred_fallthru
          _
        // Predicated region
        $region25: #{jx_forward.1} parent=19 // pred_check
          %p159 = pneg %p62
        $region26: #{jx_forward.1} parent=19 // pred_check_branch
          %161 = sbr.rel (%p159) target = $region28
        $region27: #{jx_forward.1} parent=19 // pred_region
          %s162 = sand.u32 %s16, 1
          %s163 = scalar_lea.sflag [#allocation7], %s162
          %s164 = sand.u32 %s52, 1
          %s165 = smul.addr %s164, 6144
          %s166 = scalar_lea.vmem [#allocation6], %s165
          %s167 = smul.u32 384, %s16
          %s169 = ssub.s32 98304, 98304
          %170 = vsyncadd %s163, %s169
          %s171 = smul.addr %s167, 128
          %s172 = scalar_lea.hbm %s1, %s171
          %s173 = sshll.u32 %s166, 4
          %s174 = int_to_ptr.vmem [resolvable:$true] %s173
          %179 = dma.hbm_to_vmem [thread:$0]  %s172, 98304, %s174, %s163, 196608, 49152, 3072
        $region28: #{jx_forward.1} parent=19 // pred_fallthru
          _
      $region20: #{jx_forward.1} parent=5 // pred_fallthru
        _
      %p180 = scmp.le.s32.totalorder 1, %s16
      %p181 = scmp.lt.s32.totalorder %s16, 5
      %p182 = pnand %p180, %p181
      %p183 = pneg %p182
      // Predicated region
      $region29: #{jx_forward.1} parent=5 // pred_check
        _
      $region30: #{jx_forward.1} parent=5 // pred_check_branch
        %185 = sbr.rel (%p182) target = $region32
      $region31: #{jx_forward.1} parent=5 // pred_region
        %s186 = ssub.s32 %s16, 1
        %s187 = sand.u32 %s29, 1
        %s188 = scalar_lea.sflag [#allocation4], %s187
        %s189 = sand.u32 %s29, 1
        %s190 = smul.addr %s189, 768
        %s191 = scalar_lea.vmem [#allocation3], %s190
        // Predicated region
        $region33: #{jx_forward.1} parent=31 // pred_check
          %p192 = pneg %p42
        $region34: #{jx_forward.1} parent=31 // pred_check_branch
          %194 = sbr.rel (%p192) target = $region36
        $region35: #{jx_forward.1} parent=31 // pred_region
          %195 = dma.done %s188, 12288
        $region36: #{jx_forward.1} parent=31 // pred_fallthru
          _
        %s196 = sand.u32 %s21, 1
        %s197 = scalar_lea.sflag [#allocation7], %s196
        %s198 = sand.u32 %s55, 1
        %s199 = smul.addr %s198, 6144
        %s200 = scalar_lea.vmem [#allocation6], %s199
        // Predicated region
        $region37: #{jx_forward.1} parent=31 // pred_check
          %p201 = pneg %p68
        $region38: #{jx_forward.1} parent=31 // pred_check_branch
          %203 = sbr.rel (%p201) target = $region40
        $region39: #{jx_forward.1} parent=31 // pred_region
          %204 = dma.done %s197, 98304
        $region40: #{jx_forward.1} parent=31 // pred_fallthru
          _
        // Predicated region
        $region41: #{jx_forward.1} parent=31 // pred_check
          %p205 = pneg %p89
        $region42: #{jx_forward.1} parent=31 // pred_check_branch
          %207 = sbr.rel (%p205) target = $region44
        $region43: #{jx_forward.1} parent=31 // pred_region
          %208 = dma.done [#allocation7], 16
        $region44: #{jx_forward.1} parent=31 // pred_fallthru
          _
        %s209 = sand.u32 %s29, 1
        %s210 = scalar_lea.sflag [#allocation4], %s209
        %s211 = sand.u32 %s29, 1
        %s212 = smul.addr %s211, 768
        %s213 = scalar_lea.vmem [#allocation3], %s212
        %p214 = pneg %p42
        %p215 = pneg %p39
        %s216 = sand.u32 %s21, 1
        %s217 = scalar_lea.sflag [#allocation7], %s216
        %s218 = sand.u32 %s55, 1
        %s219 = smul.addr %s218, 6144
        %s220 = scalar_lea.vmem [#allocation6], %s219
        %p221 = pneg %p68
        %p222 = pneg %p65
        %p223 = pneg %p89
        %p224 = pneg %p86
        %p225 = pneg %p110
        %p226 = pneg %p107
        %s227 = smul.u32 384, %s21
        %s228 = smul.u32 384, %s21
        %p229 = scmp.eq.s32.totalorder %s21, 0
        // Predicated region
        $region45: #{jx_forward.1} parent=31 // pred_check
          %p230 = pneg %p229
        $region46: #{jx_forward.1} parent=31 // pred_check_branch
          %232 = sbr.rel (%p230) target = $region48
        $region47: #{jx_forward.1} parent=31 // pred_region
          %233 = vst [vmem:[#allocation2] sm:$0xff] 0.0
          %234 = vst [vmem:[#allocation2 + $0x8] sm:$0xff] 0.0
          %235 = vst [vmem:[#allocation2 + $0x10] sm:$0xff] 0.0
          %236 = vst [vmem:[#allocation2 + $0x18] sm:$0xff] 0.0
          %237 = vst [vmem:[#allocation2 + $0x20] sm:$0x3] 0.0
          %238 = vst [vmem:[#allocation2 + $0x28] sm:$0x3] 0.0
          %239 = vst [vmem:[#allocation2 + $0x30] sm:$0x3] 0.0
          %240 = vst [vmem:[#allocation2 + $0x38] sm:$0x3] 0.0
          %241 = vst [vmem:[#allocation2 + $0x40] sm:$0xff] 0.0
          %242 = vst [vmem:[#allocation2 + $0x48] sm:$0xff] 0.0
          %243 = vst [vmem:[#allocation2 + $0x50] sm:$0xff] 0.0
          %244 = vst [vmem:[#allocation2 + $0x58] sm:$0xff] 0.0
          %245 = vst [vmem:[#allocation2 + $0x60] sm:$0x3] 0.0
          %246 = vst [vmem:[#allocation2 + $0x68] sm:$0x3] 0.0
          %247 = vst [vmem:[#allocation2 + $0x70] sm:$0x3] 0.0
          %248 = vst [vmem:[#allocation2 + $0x78] sm:$0x3] 0.0
        $region48: #{jx_forward.1} parent=31 // pred_fallthru
          _
        %v249 = vld [vmem:[#allocation2] sm:$0xff]
        %v250 = vld [vmem:[#allocation2 + $0x8] sm:$0xff]
        %v251 = vld [vmem:[#allocation2 + $0x10] sm:$0xff]
        %v252 = vld [vmem:[#allocation2 + $0x18] sm:$0xff]
        %v253 = vld [vmem:[#allocation2 + $0x20] sm:$0x3]
        %v254 = vld [vmem:[#allocation2 + $0x28] sm:$0x3]
        %v255 = vld [vmem:[#allocation2 + $0x30] sm:$0x3]
        %v256 = vld [vmem:[#allocation2 + $0x38] sm:$0x3]
        %s257 = scalar_lea.vmem [#allocation2], 64
        %v258 = vld [vmem:[%s257] sm:$0xff]
        %v259 = vld [vmem:[%s257 + $0x8] sm:$0xff]
        %v260 = vld [vmem:[%s257 + $0x10] sm:$0xff]
        %v261 = vld [vmem:[%s257 + $0x18] sm:$0xff]
        %v262 = vld [vmem:[%s257 + $0x20] sm:$0x3]
        %v263 = vld [vmem:[%s257 + $0x28] sm:$0x3]
        %v264 = vld [vmem:[%s257 + $0x30] sm:$0x3]
        %v265 = vld [vmem:[%s257 + $0x38] sm:$0x3]
        loop: start=0, step=1, limit=96
        $region49: #{jx_forward.1} parent=31 // loop_pre_header
          _
        $region50: #{jx_forward.1} parent=31 // loop_header
          %s267 = sphi 0, %s271
          %p268 = scmp.ge.s32.totalorder %s267, 96
          %v272 = vphi %v249, %v333
          %v273 = vphi %v250, %v334
          %v274 = vphi %v251, %v335
          %v275 = vphi %v252, %v336
          %v276 = vphi %v253, %v337
          %v277 = vphi %v254, %v338
          %v278 = vphi %v255, %v339
          %v279 = vphi %v256, %v340
          %v280 = vphi %v258, %v372
          %v281 = vphi %v259, %v373
          %v282 = vphi %v260, %v374
          %v283 = vphi %v261, %v375
          %v284 = vphi %v262, %v376
          %v285 = vphi %v263, %v377
          %v286 = vphi %v264, %v378
          %v287 = vphi %v265, %v379
        $region51: #{jx_forward.1} parent=31 // loop_header_branch
          %270 = sbr.rel (%p268) target = $region55
        $region52: #{jx_forward.1} parent=31 // loop_body
          %s288 = smul.u32 %s267, 512
          %s289 = sshra.s32 %s288, 7
          %s290 = sand.u32 %s288, 127
          %s291 = smul.addr %s289, 8
          %s292 = scalar_lea.vmem %s200, %s291 [#allocation6]
          %v293 = vld [vmem:[%s292] sm:$0xff]
          %v294 = vld [vmem:[%s292 + $0x8] sm:$0xff]
          %v295 = vld [vmem:[%s292 + $0x10] sm:$0xff]
          %v296 = vld [vmem:[%s292 + $0x18] sm:$0xff]
          %v297 = vld [vmem:[%s292 + $0xc00] sm:$0x3]
          %v298 = vld [vmem:[%s292 + $0xc08] sm:$0x3]
          %v299 = vld [vmem:[%s292 + $0xc10] sm:$0x3]
          %v300 = vld [vmem:[%s292 + $0xc18] sm:$0x3]
          %s301 = smul.addr %s289, 2
          %s302 = scalar_lea.vmem %s191, %s301 [#allocation3]
          %v303 = vld [vmem:[%s302] ss:$2 sm:$0xf]
          %v305 = vlaneseq
          %v306 = vshrl.u32 %v305, 7
          %v307 = vsub.s32 0, %v306
          %v308 = vrot.slane %v303, %v307
          %v309 = vlaneseq
          %v310 = vshrl.u32 %v309, 7
          %v311 = vsub.s32 1, %v310
          %v312 = vrot.slane %v303, %v311
          %v313 = vlaneseq
          %v314 = vshrl.u32 %v313, 7
          %v315 = vsub.s32 2, %v314
          %v316 = vrot.slane %v303, %v315
          %v317 = vlaneseq
          %v318 = vshrl.u32 %v317, 7
          %v319 = vsub.s32 3, %v318
          %v320 = vrot.slane %v303, %v319
          %v325 = vmul.f32 %v293, %v308
          %v326 = vmul.f32 %v294, %v312
          %v327 = vmul.f32 %v295, %v316
          %v328 = vmul.f32 %v296, %v320
          %v329 = vmul.f32 %v297, %v308
          %v330 = vmul.f32 %v298, %v312
          %v331 = vmul.f32 %v299, %v316
          %v332 = vmul.f32 %v300, %v320
          %v333 = vadd.f32 %v272, %v325
          %v334 = vadd.f32 %v273, %v326
          %v335 = vadd.f32 %v274, %v327
          %v336 = vadd.f32 %v275, %v328
          %v337 = vadd.f32 %v276, %v329
          %v338 = vadd.f32 %v277, %v330
          %v339 = vadd.f32 %v278, %v331
          %v340 = vadd.f32 %v279, %v332
          %s341 = scalar_lea.vmem %s302, 1 [#allocation3]
          %v342 = vld [vmem:[%s341] ss:$2 sm:$0xf]
          %v344 = vlaneseq
          %v345 = vshrl.u32 %v344, 7
          %v346 = vsub.s32 0, %v345
          %v347 = vrot.slane %v342, %v346
          %v348 = vlaneseq
          %v349 = vshrl.u32 %v348, 7
          %v350 = vsub.s32 1, %v349
          %v351 = vrot.slane %v342, %v350
          %v352 = vlaneseq
          %v353 = vshrl.u32 %v352, 7
          %v354 = vsub.s32 2, %v353
          %v355 = vrot.slane %v342, %v354
          %v356 = vlaneseq
          %v357 = vshrl.u32 %v356, 7
          %v358 = vsub.s32 3, %v357
          %v359 = vrot.slane %v342, %v358
          %v364 = vmul.f32 %v293, %v347
          %v365 = vmul.f32 %v294, %v351
          %v366 = vmul.f32 %v295, %v355
          %v367 = vmul.f32 %v296, %v359
          %v368 = vmul.f32 %v297, %v347
          %v369 = vmul.f32 %v298, %v351
          %v370 = vmul.f32 %v299, %v355
          %v371 = vmul.f32 %v300, %v359
          %v372 = vadd.f32 %v280, %v364
          %v373 = vadd.f32 %v281, %v365
          %v374 = vadd.f32 %v282, %v366
          %v375 = vadd.f32 %v283, %v367
          %v376 = vadd.f32 %v284, %v368
          %v377 = vadd.f32 %v285, %v369
          %v378 = vadd.f32 %v286, %v370
          %v379 = vadd.f32 %v287, %v371
        $region53: #{jx_forward.1} parent=31 // loop_footer
          %s271 = sadd.s32 1, %s267
        $region54: #{jx_forward.1} parent=31 // loop_footer_branch
          %266 = sbr.rel target = $region50
        $region55: #{jx_forward.1} parent=31 // loop_exit
          _
        %380 = vst [vmem:[#allocation2] sm:$0xff] %v272
        %381 = vst [vmem:[#allocation2 + $0x8] sm:$0xff] %v273
        %382 = vst [vmem:[#allocation2 + $0x10] sm:$0xff] %v274
        %383 = vst [vmem:[#allocation2 + $0x18] sm:$0xff] %v275
        %384 = vst [vmem:[#allocation2 + $0x20] sm:$0x3] %v276
        %385 = vst [vmem:[#allocation2 + $0x28] sm:$0x3] %v277
        %386 = vst [vmem:[#allocation2 + $0x30] sm:$0x3] %v278
        %387 = vst [vmem:[#allocation2 + $0x38] sm:$0x3] %v279
        %388 = vst [vmem:[%s257] sm:$0xff] %v280
        %389 = vst [vmem:[%s257 + $0x8] sm:$0xff] %v281
        %390 = vst [vmem:[%s257 + $0x10] sm:$0xff] %v282
        %391 = vst [vmem:[%s257 + $0x18] sm:$0xff] %v283
        %392 = vst [vmem:[%s257 + $0x20] sm:$0x3] %v284
        %393 = vst [vmem:[%s257 + $0x28] sm:$0x3] %v285
        %394 = vst [vmem:[%s257 + $0x30] sm:$0x3] %v286
        %395 = vst [vmem:[%s257 + $0x38] sm:$0x3] %v287
        %p396 = scmp.eq.s32.totalorder %s21, 3
        // Predicated region
        $region56: #{jx_forward.1} parent=31 // pred_check
          %p397 = pneg %p396
        $region57: #{jx_forward.1} parent=31 // pred_check_branch
          %399 = sbr.rel (%p397) target = $region59
        $region58: #{jx_forward.1} parent=31 // pred_region
          %v400 = vld [vmem:[#allocation2] sm:$0xff]
          %v401 = vld [vmem:[#allocation2 + $0x8] sm:$0xff]
          %v402 = vld [vmem:[#allocation2 + $0x10] sm:$0xff]
          %v403 = vld [vmem:[#allocation2 + $0x18] sm:$0xff]
          %v404 = vld [vmem:[#allocation2 + $0x20] sm:$0x3]
          %v405 = vld [vmem:[#allocation2 + $0x28] sm:$0x3]
          %v406 = vld [vmem:[#allocation2 + $0x30] sm:$0x3]
          %v407 = vld [vmem:[#allocation2 + $0x38] sm:$0x3]
          %v408 = vld [vmem:[#allocation8] sm:$0x1]
          %409 = vmatprep.subr.mxu0 0.0
          %410 = vmatpush1.xpose.msra.mxu0 0.0
          %411 = vmatprep.subr.mxu0 0.0
          %412 = vmatpush1.xpose.msra.mxu0 0.0
          %413 = vmatprep.subr.mxu0 0.0
          %414 = vmatpush1.xpose.msra.mxu0 0.0
          %415 = vmatprep.subr.mxu0 0.0
          %416 = vmatpush1.xpose.msra.mxu0 0.0
          %417 = vmatprep.subr.mxu0 0.0
          %418 = vmatpush1.xpose.msra.mxu0 0.0
          %419 = vmatprep.subr.mxu0 0.0
          %420 = vmatpush1.xpose.msra.mxu0 0.0
          %421 = vmatprep.subr.mxu0 0.0
          %422 = vmatpush1.xpose.msra.mxu0 0.0
          %423 = vmatprep.subr.mxu0 0.0
          %424 = vmatpush1.xpose.msra.mxu0 0.0
          %425 = vmatprep.subr.mxu0 0.0
          %426 = vmatpush1.xpose.msra.mxu0 0.0
          %427 = vmatprep.subr.mxu0 0.0
          %428 = vmatpush1.xpose.msra.mxu0 0.0
          %429 = vmatprep.subr.mxu0 0.0
          %430 = vmatpush1.xpose.msra.mxu0 0.0
          %431 = vmatprep.subr.mxu0 0.0
          %432 = vmatpush1.xpose.msra.mxu0 0.0
          %433 = vmatprep.subr.mxu0 0.0
          %434 = vmatpush1.xpose.msra.mxu0 0.0
          %435 = vmatprep.subr.mxu0 0.0
          %436 = vmatpush1.xpose.msra.mxu0 0.0
          %437 = vmatprep.subr.mxu0 %v405
          %438 = vmatpush1.xpose.msra.mxu0 %v404
          %439 = vmatprep.subr.mxu0 %v401
          %440 = vmatpush1.xpose.msra.mxu0 %v400
          %441 = vmatprep.subr.mxu0 0.0
          %442 = vmatpush2.xpose.msra.mxu0 0.0
          %443 = vmatprep.subr.mxu0 0.0
          %444 = vmatpush2.xpose.msra.mxu0 0.0
          %445 = vmatprep.subr.mxu0 0.0
          %446 = vmatpush2.xpose.msra.mxu0 0.0
          %447 = vmatprep.subr.mxu0 0.0
          %448 = vmatpush2.xpose.msra.mxu0 0.0
          %449 = vmatprep.subr.mxu0 0.0
          %450 = vmatpush2.xpose.msra.mxu0 0.0
          %451 = vmatprep.subr.mxu0 0.0
          %452 = vmatpush2.xpose.msra.mxu0 0.0
          %453 = vmatprep.subr.mxu0 0.0
          %454 = vmatpush2.xpose.msra.mxu0 0.0
          %455 = vmatprep.subr.mxu0 0.0
          %456 = vmatpush2.xpose.msra.mxu0 0.0
          %457 = vmatprep.subr.mxu0 0.0
          %458 = vmatpush2.xpose.msra.mxu0 0.0
          %459 = vmatprep.subr.mxu0 0.0
          %460 = vmatpush2.xpose.msra.mxu0 0.0
          %461 = vmatprep.subr.mxu0 0.0
          %462 = vmatpush2.xpose.msra.mxu0 0.0
          %463 = vmatprep.subr.mxu0 0.0
          %464 = vmatpush2.xpose.msra.mxu0 0.0
          %465 = vmatprep.subr.mxu0 0.0
          %466 = vmatpush2.xpose.msra.mxu0 0.0
          %467 = vmatprep.subr.mxu0 0.0
          %468 = vmatpush2.xpose.msra.mxu0 0.0
          %469 = vmatprep.subr.mxu0 0.0
          %470 = vmatpush2.xpose.msra.mxu0 0.0
          %471 = vmatprep.subr.mxu0 0.0
          %472 = vmatpush2.xpose.msra.mxu0 0.0
          %473 = vmatprep.mubr.f32.mxu0 1.0
          %474 = vmatmul.mubr.f32.gmra.mxu0 1.0
          %v475 = vpop.f32.mrf.mxu0
          %v476 = vadd.f32 %v408, %v475
          %v477 = vpop.f32.mrf.mxu0
          %478 = vdwg.mxu0
          %479 = vmatprep.subr.mxu0 0.0
          %480 = vmatpush1.xpose.msra.mxu0 0.0
          %481 = vmatprep.subr.mxu0 0.0
          %482 = vmatpush1.xpose.msra.mxu0 0.0
          %483 = vmatprep.subr.mxu0 0.0
          %484 = vmatpush1.xpose.msra.mxu0 0.0
          %485 = vmatprep.subr.mxu0 0.0
          %486 = vmatpush1.xpose.msra.mxu0 0.0
          %487 = vmatprep.subr.mxu0 0.0
          %488 = vmatpush1.xpose.msra.mxu0 0.0
          %489 = vmatprep.subr.mxu0 0.0
          %490 = vmatpush1.xpose.msra.mxu0 0.0
          %491 = vmatprep.subr.mxu0 0.0
          %492 = vmatpush1.xpose.msra.mxu0 0.0
          %493 = vmatprep.subr.mxu0 0.0
          %494 = vmatpush1.xpose.msra.mxu0 0.0
          %495 = vmatprep.subr.mxu0 0.0
          %496 = vmatpush1.xpose.msra.mxu0 0.0
          %497 = vmatprep.subr.mxu0 0.0
          %498 = vmatpush1.xpose.msra.mxu0 0.0
          %499 = vmatprep.subr.mxu0 0.0
          %500 = vmatpush1.xpose.msra.mxu0 0.0
          %501 = vmatprep.subr.mxu0 0.0
          %502 = vmatpush1.xpose.msra.mxu0 0.0
          %503 = vmatprep.subr.mxu0 0.0
          %504 = vmatpush1.xpose.msra.mxu0 0.0
          %505 = vmatprep.subr.mxu0 0.0
          %506 = vmatpush1.xpose.msra.mxu0 0.0
          %507 = vmatprep.subr.mxu0 %v407
          %508 = vmatpush1.xpose.msra.mxu0 %v406
          %509 = vmatprep.subr.mxu0 %v403
          %510 = vmatpush1.xpose.msra.mxu0 %v402
          %511 = vmatprep.subr.mxu0 0.0
          %512 = vmatpush2.xpose.msra.mxu0 0.0
          %513 = vmatprep.subr.mxu0 0.0
          %514 = vmatpush2.xpose.msra.mxu0 0.0
          %515 = vmatprep.subr.mxu0 0.0
          %516 = vmatpush2.xpose.msra.mxu0 0.0
          %517 = vmatprep.subr.mxu0 0.0
          %518 = vmatpush2.xpose.msra.mxu0 0.0
          %519 = vmatprep.subr.mxu0 0.0
          %520 = vmatpush2.xpose.msra.mxu0 0.0
          %521 = vmatprep.subr.mxu0 0.0
          %522 = vmatpush2.xpose.msra.mxu0 0.0
          %523 = vmatprep.subr.mxu0 0.0
          %524 = vmatpush2.xpose.msra.mxu0 0.0
          %525 = vmatprep.subr.mxu0 0.0
          %526 = vmatpush2.xpose.msra.mxu0 0.0
          %527 = vmatprep.subr.mxu0 0.0
          %528 = vmatpush2.xpose.msra.mxu0 0.0
          %529 = vmatprep.subr.mxu0 0.0
          %530 = vmatpush2.xpose.msra.mxu0 0.0
          %531 = vmatprep.subr.mxu0 0.0
          %532 = vmatpush2.xpose.msra.mxu0 0.0
          %533 = vmatprep.subr.mxu0 0.0
          %534 = vmatpush2.xpose.msra.mxu0 0.0
          %535 = vmatprep.subr.mxu0 0.0
          %536 = vmatpush2.xpose.msra.mxu0 0.0
          %537 = vmatprep.subr.mxu0 0.0
          %538 = vmatpush2.xpose.msra.mxu0 0.0
          %539 = vmatprep.subr.mxu0 0.0
          %540 = vmatpush2.xpose.msra.mxu0 0.0
          %541 = vmatprep.subr.mxu0 0.0
          %542 = vmatpush2.xpose.msra.mxu0 0.0
          %543 = vmatprep.mubr.f32.mxu0 1.0
          %544 = vmatmul.mubr.f32.gmra.mxu0 1.0
          %v545 = vpop.f32.mrf.mxu0
          %v546 = vadd.f32 %v476, %v545
          %v547 = vpop.f32.mrf.mxu0
          %548 = vdwg.mxu0
          %vm549 = vcmask 73728
          %550 = vst.msk [vmem:[#allocation9] sm:$0x1] %vm549, %v546
          %v551 = vld [vmem:[%s257] sm:$0xff]
          %v552 = vld [vmem:[%s257 + $0x8] sm:$0xff]
          %v553 = vld [vmem:[%s257 + $0x10] sm:$0xff]
          %v554 = vld [vmem:[%s257 + $0x18] sm:$0xff]
          %v555 = vld [vmem:[%s257 + $0x20] sm:$0x3]
          %v556 = vld [vmem:[%s257 + $0x28] sm:$0x3]
          %v557 = vld [vmem:[%s257 + $0x30] sm:$0x3]
          %v558 = vld [vmem:[%s257 + $0x38] sm:$0x3]
          %v559 = vld [vmem:[#allocation8] sm:$0x1]
          %560 = vmatprep.subr.mxu0 0.0
          %561 = vmatpush1.xpose.msra.mxu0 0.0
          %562 = vmatprep.subr.mxu0 0.0
          %563 = vmatpush1.xpose.msra.mxu0 0.0
          %564 = vmatprep.subr.mxu0 0.0
          %565 = vmatpush1.xpose.msra.mxu0 0.0
          %566 = vmatprep.subr.mxu0 0.0
          %567 = vmatpush1.xpose.msra.mxu0 0.0
          %568 = vmatprep.subr.mxu0 0.0
          %569 = vmatpush1.xpose.msra.mxu0 0.0
          %570 = vmatprep.subr.mxu0 0.0
          %571 = vmatpush1.xpose.msra.mxu0 0.0
          %572 = vmatprep.subr.mxu0 0.0
          %573 = vmatpush1.xpose.msra.mxu0 0.0
          %574 = vmatprep.subr.mxu0 0.0
          %575 = vmatpush1.xpose.msra.mxu0 0.0
          %576 = vmatprep.subr.mxu0 0.0
          %577 = vmatpush1.xpose.msra.mxu0 0.0
          %578 = vmatprep.subr.mxu0 0.0
          %579 = vmatpush1.xpose.msra.mxu0 0.0
          %580 = vmatprep.subr.mxu0 0.0
          %581 = vmatpush1.xpose.msra.mxu0 0.0
          %582 = vmatprep.subr.mxu0 0.0
          %583 = vmatpush1.xpose.msra.mxu0 0.0
          %584 = vmatprep.subr.mxu0 0.0
          %585 = vmatpush1.xpose.msra.mxu0 0.0
          %586 = vmatprep.subr.mxu0 0.0
          %587 = vmatpush1.xpose.msra.mxu0 0.0
          %588 = vmatprep.subr.mxu0 %v556
          %589 = vmatpush1.xpose.msra.mxu0 %v555
          %590 = vmatprep.subr.mxu0 %v552
          %591 = vmatpush1.xpose.msra.mxu0 %v551
          %592 = vmatprep.subr.mxu0 0.0
          %593 = vmatpush2.xpose.msra.mxu0 0.0
          %594 = vmatprep.subr.mxu0 0.0
          %595 = vmatpush2.xpose.msra.mxu0 0.0
          %596 = vmatprep.subr.mxu0 0.0
          %597 = vmatpush2.xpose.msra.mxu0 0.0
          %598 = vmatprep.subr.mxu0 0.0
          %599 = vmatpush2.xpose.msra.mxu0 0.0
          %600 = vmatprep.subr.mxu0 0.0
          %601 = vmatpush2.xpose.msra.mxu0 0.0
          %602 = vmatprep.subr.mxu0 0.0
          %603 = vmatpush2.xpose.msra.mxu0 0.0
          %604 = vmatprep.subr.mxu0 0.0
          %605 = vmatpush2.xpose.msra.mxu0 0.0
          %606 = vmatprep.subr.mxu0 0.0
          %607 = vmatpush2.xpose.msra.mxu0 0.0
          %608 = vmatprep.subr.mxu0 0.0
          %609 = vmatpush2.xpose.msra.mxu0 0.0
          %610 = vmatprep.subr.mxu0 0.0
          %611 = vmatpush2.xpose.msra.mxu0 0.0
          %612 = vmatprep.subr.mxu0 0.0
          %613 = vmatpush2.xpose.msra.mxu0 0.0
          %614 = vmatprep.subr.mxu0 0.0
          %615 = vmatpush2.xpose.msra.mxu0 0.0
          %616 = vmatprep.subr.mxu0 0.0
          %617 = vmatpush2.xpose.msra.mxu0 0.0
          %618 = vmatprep.subr.mxu0 0.0
          %619 = vmatpush2.xpose.msra.mxu0 0.0
          %620 = vmatprep.subr.mxu0 0.0
          %621 = vmatpush2.xpose.msra.mxu0 0.0
          %622 = vmatprep.subr.mxu0 0.0
          %623 = vmatpush2.xpose.msra.mxu0 0.0
          %624 = vmatprep.mubr.f32.mxu0 1.0
          %625 = vmatmul.mubr.f32.gmra.mxu0 1.0
          %v626 = vpop.f32.mrf.mxu0
          %v627 = vadd.f32 %v559, %v626
          %v628 = vpop.f32.mrf.mxu0
          %629 = vdwg.mxu0
          %630 = vmatprep.subr.mxu0 0.0
          %631 = vmatpush1.xpose.msra.mxu0 0.0
          %632 = vmatprep.subr.mxu0 0.0
          %633 = vmatpush1.xpose.msra.mxu0 0.0
          %634 = vmatprep.subr.mxu0 0.0
          %635 = vmatpush1.xpose.msra.mxu0 0.0
          %636 = vmatprep.subr.mxu0 0.0
          %637 = vmatpush1.xpose.msra.mxu0 0.0
          %638 = vmatprep.subr.mxu0 0.0
          %639 = vmatpush1.xpose.msra.mxu0 0.0
          %640 = vmatprep.subr.mxu0 0.0
          %641 = vmatpush1.xpose.msra.mxu0 0.0
          %642 = vmatprep.subr.mxu0 0.0
          %643 = vmatpush1.xpose.msra.mxu0 0.0
          %644 = vmatprep.subr.mxu0 0.0
          %645 = vmatpush1.xpose.msra.mxu0 0.0
          %646 = vmatprep.subr.mxu0 0.0
          %647 = vmatpush1.xpose.msra.mxu0 0.0
          %648 = vmatprep.subr.mxu0 0.0
          %649 = vmatpush1.xpose.msra.mxu0 0.0
          %650 = vmatprep.subr.mxu0 0.0
          %651 = vmatpush1.xpose.msra.mxu0 0.0
          %652 = vmatprep.subr.mxu0 0.0
          %653 = vmatpush1.xpose.msra.mxu0 0.0
          %654 = vmatprep.subr.mxu0 0.0
          %655 = vmatpush1.xpose.msra.mxu0 0.0
          %656 = vmatprep.subr.mxu0 0.0
          %657 = vmatpush1.xpose.msra.mxu0 0.0
          %658 = vmatprep.subr.mxu0 %v558
          %659 = vmatpush1.xpose.msra.mxu0 %v557
          %660 = vmatprep.subr.mxu0 %v554
          %661 = vmatpush1.xpose.msra.mxu0 %v553
          %662 = vmatprep.subr.mxu0 0.0
          %663 = vmatpush2.xpose.msra.mxu0 0.0
          %664 = vmatprep.subr.mxu0 0.0
          %665 = vmatpush2.xpose.msra.mxu0 0.0
          %666 = vmatprep.subr.mxu0 0.0
          %667 = vmatpush2.xpose.msra.mxu0 0.0
          %668 = vmatprep.subr.mxu0 0.0
          %669 = vmatpush2.xpose.msra.mxu0 0.0
          %670 = vmatprep.subr.mxu0 0.0
          %671 = vmatpush2.xpose.msra.mxu0 0.0
          %672 = vmatprep.subr.mxu0 0.0
          %673 = vmatpush2.xpose.msra.mxu0 0.0
          %674 = vmatprep.subr.mxu0 0.0
          %675 = vmatpush2.xpose.msra.mxu0 0.0
          %676 = vmatprep.subr.mxu0 0.0
          %677 = vmatpush2.xpose.msra.mxu0 0.0
          %678 = vmatprep.subr.mxu0 0.0
          %679 = vmatpush2.xpose.msra.mxu0 0.0
          %680 = vmatprep.subr.mxu0 0.0
          %681 = vmatpush2.xpose.msra.mxu0 0.0
          %682 = vmatprep.subr.mxu0 0.0
          %683 = vmatpush2.xpose.msra.mxu0 0.0
          %684 = vmatprep.subr.mxu0 0.0
          %685 = vmatpush2.xpose.msra.mxu0 0.0
          %686 = vmatprep.subr.mxu0 0.0
          %687 = vmatpush2.xpose.msra.mxu0 0.0
          %688 = vmatprep.subr.mxu0 0.0
          %689 = vmatpush2.xpose.msra.mxu0 0.0
          %690 = vmatprep.subr.mxu0 0.0
          %691 = vmatpush2.xpose.msra.mxu0 0.0
          %692 = vmatprep.subr.mxu0 0.0
          %693 = vmatpush2.xpose.msra.mxu0 0.0
          %694 = vmatprep.mubr.f32.mxu0 1.0
          %695 = vmatmul.mubr.f32.gmra.mxu0 1.0
          %v696 = vpop.f32.mrf.mxu0
          %v697 = vadd.f32 %v627, %v696
          %v698 = vpop.f32.mrf.mxu0
          %699 = vdwg.mxu0
          %700 = vst.msk [vmem:[#allocation9 + $0x1] sm:$0x1] %vm549, %v697
        $region59: #{jx_forward.1} parent=31 // pred_fallthru
          _
        // Predicated region
        $region60: #{jx_forward.1} parent=31 // pred_check
          %p701 = pneg %p107
        $region61: #{jx_forward.1} parent=31 // pred_check_branch
          %703 = sbr.rel (%p701) target = $region63
        $region62: #{jx_forward.1} parent=31 // pred_region
          %s705 = ssub.s32 32, 32
          %706 = vsyncadd [#allocation5], %s705
          %s708 = sshll.u32 [#allocation9], 4
          %s709 = int_to_ptr.vmem [resolvable:$true] %s708
          %711 = dma.vmem_to_hbm [thread:$0]  %s709, 32, %s3, [#allocation5]
        $region63: #{jx_forward.1} parent=31 // pred_fallthru
          _
        // Predicated region
        $region64: #{jx_forward.1} parent=31 // pred_check
          %p712 = pneg %p107
        $region65: #{jx_forward.1} parent=31 // pred_check_branch
          %714 = sbr.rel (%p712) target = $region67
        $region66: #{jx_forward.1} parent=31 // pred_region
          %715 = dma.done [#allocation5], 32
        $region67: #{jx_forward.1} parent=31 // pred_fallthru
          _
      $region32: #{jx_forward.1} parent=5 // pred_fallthru
        _
      %p716 = scmp.le.s32.totalorder 2, %s16
      // Predicated region
      $region68: #{jx_forward.1} parent=5 // pred_check
        %p717 = pneg %p716
      $region69: #{jx_forward.1} parent=5 // pred_check_branch
        %719 = sbr.rel (%p717) target = $region71
      $region70: #{jx_forward.1} parent=5 // pred_region
        %s720 = ssub.s32 %s16, 2
      $region71: #{jx_forward.1} parent=5 // pred_fallthru
        _
    $region6: #{jx_forward.1} parent=1 // loop_footer
      %s20 = sadd.s32 1, %s16
    $region7: #{jx_forward.1} parent=1 // loop_footer_branch
      %15 = sbr.rel target = $region3
    $region8: #{jx_forward.1} parent=1 // loop_exit
      _
    %721 = vsyncpa [#allocation4], 1
    %s722 = scalar_lea.sflag [#allocation4], 1
    %723 = vsyncpa %s722, 1
    %724 = vsyncpa [#allocation7], 1
    %s725 = scalar_lea.sflag [#allocation7], 1
    %726 = vsyncpa %s725, 1
    %727 = vsyncpa [#allocation5], 1
    %s728 = scalar_lea.sflag [#allocation5], 1
    %729 = vsyncpa %s728, 1

</llo_original>
